<compile_context>
chip_gen: v7x
topology: tpu7x:2x2x1
jax: 0.10.0
libtpu: 0.0.40
codegen_flags: <defaults>
</compile_context>

<pallas_src>
import jax
import jax.numpy as jnp
from jax import lax
from jax.experimental import pallas as pl
from jax.experimental.pallas import tpu as pltpu

_EPS = 1e-12  # PyTorch F.normalize default eps


def _l2_normalize_kernel(x_ref, o_ref):
    # Block layouts:
    #   Mode A (HW-tiled):  (C, t_hw)     -> reduce axis -2 (sublanes)
    #   Mode B (N-batched): (t_n, C, HW)  -> reduce axis -2 (sublanes)
    x = x_ref[...]
    xf = x.astype(jnp.float32)
    sumsq = jnp.sum(xf * xf, axis=-2, keepdims=True)            # XLU sublane reduce
    # x / max(sqrt(s), eps) == x * rsqrt(max(s, eps^2))   (sqrt is monotone); EUP rsqrt.
    scale = lax.rsqrt(jnp.maximum(sumsq, jnp.float32(_EPS * _EPS)))
    if x.dtype == jnp.float32:
        o_ref[...] = (xf * scale).astype(o_ref.dtype)
    else:
        # Narrow dtypes (bf16/fp8): keep only the sum-of-squares in f32 and multiply in
        # the input dtype -- halves live intermediate bytes per block.
        o_ref[...] = (x * scale.astype(x.dtype)).astype(o_ref.dtype)


def _round_up(a, b):
    return (a + b - 1) // b * b


def normalize(x, p=2, *, target_block_bytes=4 * 1024 * 1024):
    """Equivalent of F.normalize(x, p=2, dim=1) for arrays with ndim >= 2 (NCHW typical)."""
    assert p == 2, "only p=2 (the module default) is implemented"
    # TODO(synk): general p-norm (p != 2) not implemented; module default is p=2.
    assert x.ndim >= 2
    N, C = int(x.shape[0]), int(x.shape[1])
    HW = 1
    for d in x.shape[2:]:
        HW *= int(d)
    x3 = x.reshape(N, C, HW)  # contiguous view: no HBM transpose / extra copy

    itemsize = jnp.dtype(x.dtype).itemsize
    # Sublane packing (f32 -> 8, bf16 -> 16, int8/fp8 -> 32): VMEM tiles pad C up to this.
    sub_pack = max(8, 32 // itemsize)
    c_pad = _round_up(C, sub_pack)
    hw_pad = _round_up(HW, 128)
    # Minimum contiguous DMA segment per block row (~2 KiB).
    min_lanes = max(128, 2048 // itemsize)

    # Layout-padded VMEM bytes of one full (C, HW) slab.
    slab_bytes = c_pad * hw_pad * itemsize

    if N >= 2 and slab_bytes < target_block_bytes:
        # ---- Mode B: batch whole samples per block: (t_n, C, HW) --------------------
        desired = max(1, min(target_block_bytes // slab_bytes, N))
        desired = min(desired, max(1, N // 2))        # guarantee >= 2 grid steps (2 TCs)
        t_n = 1
        for cand in range(desired, 0, -1):            # divisor of N: no ragged N-block
            if N % cand == 0:
                t_n = cand
                break
        n_blocks = N // t_n
        grid = (n_blocks,)
        block = (t_n, C, HW)                          # last two dims = full extents (legal)
        index_map = lambda i: (i, 0, 0)
        semantics = ("parallel",)
        block_pad_bytes = t_n * c_pad * hw_pad * itemsize
        block_f32_bytes = t_n * c_pad * hw_pad * 4
    else:
        # ---- Mode A: tile the spatial (lane) axis: (Squeezed, C, t_hw) --------------
        max_lanes = (target_block_bytes // max(1, c_pad * itemsize)) // 128 * 128
        max_lanes = max(max_lanes, min_lanes)
        hard_cap = 6 * 1024 * 1024                    # keep double-buffered blocks sane
        if c_pad * itemsize * max_lanes > hard_cap:
            max_lanes = max(128, (hard_cap // (c_pad * itemsize)) // 128 * 128)

        t_hw = HW if HW <= max_lanes else max_lanes   # full extent OR a 128-multiple
        n_hw = pl.cdiv(HW, t_hw)
        if N == 1 and n_hw == 1 and HW >= 2 * 128:
            # A (1,1) grid would leave one v7x TensorCore idle: split into 2 lane tiles.
            t_hw = pl.cdiv(pl.cdiv(HW, 2), 128) * 128
            n_hw = pl.cdiv(HW, t_hw)
        grid = (N, n_hw)
        block = (pl.Squeezed(), C, t_hw)
        index_map = lambda n, j: (n, 0, j)
        semantics = ("parallel", "parallel")
        block_pad_bytes = c_pad * _round_up(t_hw, 128) * itemsize
        block_f32_bytes = c_pad * _round_up(t_hw, 128) * 4

    # Double-buffered in + out blocks, f32 compute intermediates, plus headroom.
    # Cap at 48 MiB so v7x (64 MiB VMEM / TC) is safe; floor at the v5e 16 MiB default.
    vmem_est = 4 * block_pad_bytes + 3 * block_f32_bytes + (2 << 20)
    vmem_limit = int(min(48 << 20, max(16 << 20, vmem_est)))

    out3 = pl.pallas_call(
        _l2_normalize_kernel,
        out_shape=jax.ShapeDtypeStruct((N, C, HW), x.dtype),
        grid_spec=pltpu.PrefetchScalarGridSpec(
            num_scalar_prefetch=0,
            grid=grid,
            in_specs=[pl.BlockSpec(block, index_map)],
            out_specs=pl.BlockSpec(block, index_map),
        ),
        compiler_params=pltpu.CompilerParams(
            dimension_semantics=semantics,
            vmem_limit_bytes=vmem_limit,
        ),
    )(x3)

    return out3.reshape(x.shape)


def _ref_normalize(x):
    xf = x.astype(jnp.float32)
    n = jnp.sqrt(jnp.sum(xf * xf, axis=1, keepdims=True))
    return (xf / jnp.maximum(n, _EPS)).astype(x.dtype)


if __name__ == "__main__":
    key = jax.random.PRNGKey(0)

    # 1) Typical small NCHW input -> Mode B (N-batched blocks, 2-step parallel grid).
    x = jax.random.normal(key, (2, 4, 16, 16), dtype=jnp.float32)
    out = normalize(x, p=2)
    jax.block_until_ready(out)
    assert out.shape == x.shape and out.dtype == x.dtype
    assert jnp.allclose(out, _ref_normalize(x), atol=1e-6, rtol=1e-6)

    # 2) Force Mode A (lane-tiled) with a non-128-multiple spatial extent.
    x2 = jax.random.normal(jax.random.PRNGKey(0), (2, 4, 18, 18), dtype=jnp.float32)
    out2 = normalize(x2, p=2, target_block_bytes=2048)
    jax.block_until_ready(out2)
    assert jnp.allclose(out2, _ref_normalize(x2), atol=1e-6, rtol=1e-6)

    # 3) Mode A multi-tile path with a masked edge block along lanes (N=1, HW=676 > 512).
    x3 = jax.random.normal(jax.random.PRNGKey(0), (1, 4, 26, 26), dtype=jnp.float32)
    out3 = normalize(x3, p=2, target_block_bytes=2048)
    jax.block_until_ready(out3)
    assert jnp.allclose(out3, _ref_normalize(x3), atol=1e-6, rtol=1e-6)

    # 4) Single-sample input: grid must still split into >= 2 steps (two-TC sharding).
    x4 = jax.random.normal(jax.random.PRNGKey(0), (1, 4, 16, 16), dtype=jnp.float32)
    out4 = normalize(x4, p=2)
    jax.block_until_ready(out4)
    assert jnp.allclose(out4, _ref_normalize(x4), atol=1e-6, rtol=1e-6)

    # 5) bf16 path (f32 sum-of-squares, in-dtype epilogue multiply).
    xb = jax.random.normal(jax.random.PRNGKey(0), (2, 4, 16, 16), dtype=jnp.bfloat16)
    outb = normalize(xb, p=2)
    jax.block_until_ready(outb)
    assert outb.dtype == jnp.bfloat16
    assert jnp.allclose(outb.astype(jnp.float32),
                        _ref_normalize(xb).astype(jnp.float32),
                        atol=5e-2, rtol=5e-2)

    print("KERNEL_OK")
</pallas_src>

<mosaic_0001>
module attributes {stable_mosaic.version = 11 : i64} {
  func.func @_l2_normalize_kernel(%arg0: i32, %arg1: memref<1x4x256xf32, #tpu.memory_space<vmem>>, %arg2: memref<1x4x256xf32, #tpu.memory_space<vmem>>) attributes {dimension_semantics = [#tpu.dimension_semantics<parallel>], iteration_bounds = array<i64: 2>, scalar_prefetch = 0 : i64, scratch_operands = 0 : i64, tpu.core_type = #tpu.core_type<tc>, window_params = [{transform_indices = @transform_0, window_bounds = array<i64: 1, 4, 256>}, {transform_indices = @transform_1, window_bounds = array<i64: 1, 4, 256>}]} {
    %c0 = arith.constant 0 : index
    %c0_0 = arith.constant 0 : index
    %c0_1 = arith.constant 0 : index
    %0 = vector.load %arg1[%c0, %c0_0, %c0_1] : memref<1x4x256xf32, #tpu.memory_space<vmem>>, vector<1x4x256xf32>
    %1 = arith.mulf %0, %0 : vector<1x4x256xf32>
    %cst = arith.constant dense<0.000000e+00> : vector<1x256xf32>
    %2 = vector.multi_reduction <add>, %1, %cst [1] : vector<1x4x256xf32> to vector<1x256xf32>
    %3 = vector.shape_cast %2 : vector<1x256xf32> to vector<1x1x256xf32>
    %cst_2 = arith.constant 1.000000e-24 : f32
    %4 = vector.broadcast %cst_2 : f32 to vector<1x1x256xf32>
    %5 = arith.maximumf %3, %4 : vector<1x1x256xf32>
    %6 = math.rsqrt %5 : vector<1x1x256xf32>
    %7 = vector.broadcast %6 : vector<1x1x256xf32> to vector<1x4x256xf32>
    %8 = arith.mulf %0, %7 : vector<1x4x256xf32>
    %c0_3 = arith.constant 0 : index
    %c0_4 = arith.constant 0 : index
    %c0_5 = arith.constant 0 : index
    %9 = vector.load %arg2[%c0_3, %c0_4, %c0_5] : memref<1x4x256xf32, #tpu.memory_space<vmem>>, vector<1x4x256xf32>
    tpu.vector_store %arg2[%c0_3, %c0_4, %c0_5], %8 {strides = array<i32>} : memref<1x4x256xf32, #tpu.memory_space<vmem>>, vector<1x4x256xf32>,
    return
  }
  func.func @transform_0(%arg0: i32) -> (i32, i32, i32) {
    %c0_i32 = arith.constant 0 : i32
    %c0_i32_0 = arith.constant 0 : i32
    %c0_i32_1 = arith.constant 0 : i32
    return %arg0, %c0_i32, %c0_i32_0 : i32, i32, i32
  }
  func.func @transform_1(%arg0: i32) -> (i32, i32, i32) {
    %c0_i32 = arith.constant 0 : i32
    %c0_i32_0 = arith.constant 0 : i32
    %c0_i32_1 = arith.constant 0 : i32
    return %arg0, %c0_i32, %c0_i32_0 : i32, i32, i32
  }
}

</mosaic_0001>

<llo_original>
// kernel: tpu_custom_call.1
$region0: #{tpu_custom_call.1}
  #allocation0 [shape = 'u32[]', space=smem, size = 0x4, offset = 0x4, fixed_abs, tag = 'smem constant byte address 0x4 - core index']
  #allocation1 [shape = 'u32[144,128]{1,0:T(1,128)}', space=vmem, size = 0x12000, scoped, tag = 'internal scratch']
  %s0 = inlined_call_operand.hbm [shape: f32[2,4,256], index: 0, kind: input, shape index: {}]
  %s1 = inlined_call_operand.hbm [shape: f32[2,4,256], index: 1, kind: output, shape index: {}]
  %s2 = sld [smem:[#allocation0]]
  $region41: #{tpu_custom_call.1} parent=0
    _
  %s4 = ssub.s32 1, %s2
  %s5 = scalar_select 0, %s4, %s2
  $region1: #{tpu_custom_call.1} parent=0
    #allocation2 [shape = 'u8[8192]{0}', space=vmem, size = 0x2000, scoped, tag = 'input window, operand 0']
    #allocation3 [shape = 's32[2]{0}', space=sflag, size = 0x8, scoped, tag = 'scoped memory for tpu_custom_call.1']
    #allocation4 [shape = 's32[2]{0}', space=sflag, size = 0x8, scoped, tag = 'scoped memory for tpu_custom_call.1']
    #allocation5 [shape = 'u8[8192]{0}', space=vmem, size = 0x2000, scoped, tag = 'output window, operand 0']
    %6 = vsyncpa [#allocation3], 0
    %s7 = scalar_lea.sflag [#allocation3], 1
    %8 = vsyncpa %s7, 0
    %9 = vsyncpa [#allocation4], 0
    %s10 = scalar_lea.sflag [#allocation4], 1
    %11 = vsyncpa %s10, 0
    loop: start=0, step=1, limit=4
    $region2: #{tpu_custom_call.1} parent=1 // loop_pre_header
      _
    $region3: #{tpu_custom_call.1} parent=1 // loop_header
      %s13 = sphi 0, %s17
      %p14 = scmp.ge.s32.totalorder %s13, 4
      %s23 = sphi 0, %s25
      %s26 = sphi 0, %s23
      %s27 = sphi 0, %s26
      %s43 = sphi 0, %s27
      %s49 = sphi 0, %s51
      %s52 = sphi 0, %s49
      %s53 = sphi 0, %s52
      %s69 = sphi 0, %s53
    $region4: #{tpu_custom_call.1} parent=1 // loop_header_branch
      %16 = sbr.rel (%p14) target = $region8
    $region5: #{tpu_custom_call.1} parent=1 // loop_body
      %s18 = ssub.s32 %s13, 1
      %s19 = ssub.s32 %s13, 2
      %s20 = sadd.s32 %s13, 1
      %s21 = ssub.s32 %s13, %s20
      %p22 = scmp.eq.s32.totalorder %s21, 0
      %s24 = sadd.s32 %s23, 1
      %s25 = scalar_select %p22, %s23, %s24
      %p28 = pneg %p22
      %p29 = scmp.eq.s32.totalorder %s13, 1
      %p30 = por %p28, %p29
      %p31 = scmp.ne.s32.totalorder %s23, %s26
      %p32 = scmp.eq.s32.totalorder %s13, 0
      %p33 = por %p31, %p32
      %p34 = scmp.ne.s32.totalorder %s23, %s26
      %p35 = scmp.eq.s32.totalorder %s18, 1
      %p36 = por %p34, %p35
      %p37 = scmp.ne.s32.totalorder %s26, %s27
      %p38 = scmp.eq.s32.totalorder %s18, 0
      %p39 = por %p37, %p38
      %p40 = scmp.ne.s32.totalorder %s26, %s27
      %p41 = scmp.eq.s32.totalorder %s19, 1
      %p42 = por %p40, %p41
      %p44 = scmp.ne.s32.totalorder %s27, %s43
      %p45 = scmp.eq.s32.totalorder %s19, 0
      %p46 = por %p44, %p45
      %s47 = ssub.s32 %s13, %s20
      %p48 = scmp.eq.s32.totalorder %s47, 0
      %s50 = sadd.s32 %s49, 1
      %s51 = scalar_select %p48, %s49, %s50
      %p54 = pneg %p48
      %p55 = scmp.eq.s32.totalorder %s13, 1
      %p56 = por %p54, %p55
      %p57 = scmp.ne.s32.totalorder %s49, %s52
      %p58 = scmp.eq.s32.totalorder %s13, 0
      %p59 = por %p57, %p58
      %p60 = scmp.ne.s32.totalorder %s49, %s52
      %p61 = scmp.eq.s32.totalorder %s18, 1
      %p62 = por %p60, %p61
      %p63 = scmp.ne.s32.totalorder %s52, %s53
      %p64 = scmp.eq.s32.totalorder %s18, 0
      %p65 = por %p63, %p64
      %p66 = scmp.ne.s32.totalorder %s52, %s53
      %p67 = scmp.eq.s32.totalorder %s19, 1
      %p68 = por %p66, %p67
      %p70 = scmp.ne.s32.totalorder %s53, %s69
      %p71 = scmp.eq.s32.totalorder %s19, 0
      %p72 = por %p70, %p71
      %p73 = scmp.le.s32.totalorder 1, %s13
      %p74 = scmp.lt.s32.totalorder %s13, 3
      %p75 = pnand %p73, %p74
      %p76 = pneg %p75
      // Predicated region
      $region9: #{tpu_custom_call.1} parent=5 // pred_check
        _
      $region10: #{tpu_custom_call.1} parent=5 // pred_check_branch
        %78 = sbr.rel (%p75) target = $region12
      $region11: #{tpu_custom_call.1} parent=5 // pred_region
        %s79 = ssub.s32 %s13, 1
      $region12: #{tpu_custom_call.1} parent=5 // pred_fallthru
        _
      %p80 = scmp.lt.s32.totalorder %s13, 2
      // Predicated region
      $region13: #{tpu_custom_call.1} parent=5 // pred_check
        %p81 = pneg %p80
      $region14: #{tpu_custom_call.1} parent=5 // pred_check_branch
        %83 = sbr.rel (%p81) target = $region16
      $region15: #{tpu_custom_call.1} parent=5 // pred_region
        // Predicated region
        $region17: #{tpu_custom_call.1} parent=15 // pred_check
          %p84 = pneg %p33
        $region18: #{tpu_custom_call.1} parent=15 // pred_check_branch
          %86 = sbr.rel (%p84) target = $region20
        $region19: #{tpu_custom_call.1} parent=15 // pred_region
          %s87 = sand.u32 %s23, 1
          %s88 = scalar_lea.sflag [#allocation3], %s87
          %s89 = sand.u32 %s23, 1
          %s90 = smul.addr %s89, 8
          %s91 = scalar_lea.vmem [#allocation2], %s90
          %s93 = ssub.s32 128, 128
          %94 = vsyncadd %s88, %s93
          %s95 = smul.addr %s13, 2
          %s96 = smul.addr %s95, 64
          %s97 = scalar_lea.hbm %s0, %s96
          %s99 = sshll.u32 %s91, 4
          %s100 = int_to_ptr.vmem [resolvable:$true] %s99
          %102 = dma.hbm_to_vmem [thread:$0]  %s97, 128, %s100, %s88
        $region20: #{tpu_custom_call.1} parent=15 // pred_fallthru
          _
      $region16: #{tpu_custom_call.1} parent=5 // pred_fallthru
        _
      %p103 = scmp.le.s32.totalorder 1, %s13
      %p104 = scmp.lt.s32.totalorder %s13, 3
      %p105 = pnand %p103, %p104
      %p106 = pneg %p105
      // Predicated region
      $region21: #{tpu_custom_call.1} parent=5 // pred_check
        _
      $region22: #{tpu_custom_call.1} parent=5 // pred_check_branch
        %108 = sbr.rel (%p105) target = $region24
      $region23: #{tpu_custom_call.1} parent=5 // pred_region
        %s109 = ssub.s32 %s13, 1
        %s110 = sand.u32 %s26, 1
        %s111 = scalar_lea.sflag [#allocation3], %s110
        %s112 = sand.u32 %s26, 1
        %s113 = smul.addr %s112, 8
        %s114 = scalar_lea.vmem [#allocation2], %s113
        // Predicated region
        $region25: #{tpu_custom_call.1} parent=23 // pred_check
          %p115 = pneg %p39
        $region26: #{tpu_custom_call.1} parent=23 // pred_check_branch
          %117 = sbr.rel (%p115) target = $region28
        $region27: #{tpu_custom_call.1} parent=23 // pred_region
          %118 = dma.done %s111, 128
        $region28: #{tpu_custom_call.1} parent=23 // pred_fallthru
          _
        %s119 = sand.u32 %s26, 1
        %s120 = scalar_lea.sflag [#allocation3], %s119
        %s121 = sand.u32 %s26, 1
        %s122 = smul.addr %s121, 8
        %s123 = scalar_lea.vmem [#allocation2], %s122
        %p124 = pneg %p39
        %p125 = pneg %p36
        %p126 = pneg %p65
        %p127 = pneg %p62
        %s128 = sand.u32 %s52, 1
        %s129 = scalar_lea.sflag [#allocation4], %s128
        %s130 = sand.u32 %s52, 1
        %s131 = smul.addr %s130, 8
        %s132 = scalar_lea.vmem [#allocation5], %s131
        %v133 = vld [vmem:[%s114] sm:$0xff]
        %v134 = vmul.f32 %v133, %v133
        %v136 = vcombine.high %v134, %v134
        %vm138 = vcmask 1043456
        %v139 = vsel %vm138, %v134, 0.0
        %v140 = vrot.slane %v139, 4
        %v141 = vadd.f32 %v139, %v140
        %v142 = vrot.slane %v141, 2
        %v143 = vadd.f32 %v141, %v142
        %v144 = vrot.slane %v143, 1
        %v145 = vadd.f32 %v143, %v144
        %v146 = vsel %vm138, %v136, 0.0
        %v147 = vrot.slane %v146, 4
        %v148 = vadd.f32 %v146, %v147
        %v149 = vrot.slane %v148, 2
        %v150 = vadd.f32 %v148, %v149
        %v151 = vrot.slane %v150, 1
        %v152 = vadd.f32 %v150, %v151
        %v153 = vmax.f32 %v145, 1e-24
        %v154 = vmax.f32 %v152, 1e-24
        %v155 = vrsqrt.pop %v153
        %v156 = vrsqrt.pop %v154
        %v159 = vcombine.low %v155, %v156
        %v161 = vmul.f32 %v133, %v159
        %162 = vst [vmem:[%s132] sm:$0xff] %v161
        %s163 = sand.u32 %s52, 1
        %s164 = scalar_lea.sflag [#allocation4], %s163
        %s165 = sand.u32 %s52, 1
        %s166 = smul.addr %s165, 8
        %s167 = scalar_lea.vmem [#allocation5], %s166
        // Predicated region
        $region29: #{tpu_custom_call.1} parent=23 // pred_check
          %p168 = pneg %p62
        $region30: #{tpu_custom_call.1} parent=23 // pred_check_branch
          %170 = sbr.rel (%p168) target = $region32
        $region31: #{tpu_custom_call.1} parent=23 // pred_region
          %s172 = ssub.s32 128, 128
          %173 = vsyncadd %s164, %s172
          %s174 = smul.addr %s18, 2
          %s175 = smul.addr %s174, 64
          %s176 = scalar_lea.hbm %s1, %s175
          %s178 = sshll.u32 %s167, 4
          %s179 = int_to_ptr.vmem [resolvable:$true] %s178
          %181 = dma.vmem_to_hbm [thread:$0]  %s179, 128, %s176, %s164
        $region32: #{tpu_custom_call.1} parent=23 // pred_fallthru
          _
      $region24: #{tpu_custom_call.1} parent=5 // pred_fallthru
        _
      %p182 = scmp.le.s32.totalorder 2, %s13
      // Predicated region
      $region33: #{tpu_custom_call.1} parent=5 // pred_check
        %p183 = pneg %p182
      $region34: #{tpu_custom_call.1} parent=5 // pred_check_branch
        %185 = sbr.rel (%p183) target = $region36
      $region35: #{tpu_custom_call.1} parent=5 // pred_region
        %s186 = ssub.s32 %s13, 2
        // Predicated region
        $region37: #{tpu_custom_call.1} parent=35 // pred_check
          %p187 = pneg %p68
        $region38: #{tpu_custom_call.1} parent=35 // pred_check_branch
          %189 = sbr.rel (%p187) target = $region40
        $region39: #{tpu_custom_call.1} parent=35 // pred_region
          %s190 = sand.u32 %s53, 1
          %s191 = scalar_lea.sflag [#allocation4], %s190
          %s192 = sand.u32 %s53, 1
          %s193 = smul.addr %s192, 8
          %s194 = scalar_lea.vmem [#allocation5], %s193
          %195 = dma.done %s191, 128
        $region40: #{tpu_custom_call.1} parent=35 // pred_fallthru
          _
      $region36: #{tpu_custom_call.1} parent=5 // pred_fallthru
        _
    $region6: #{tpu_custom_call.1} parent=1 // loop_footer
      %s17 = sadd.s32 1, %s13
    $region7: #{tpu_custom_call.1} parent=1 // loop_footer_branch
      %12 = sbr.rel target = $region3
    $region8: #{tpu_custom_call.1} parent=1 // loop_exit
      _
    %196 = vsyncpa [#allocation3], 1
    %s197 = scalar_lea.sflag [#allocation3], 1
    %198 = vsyncpa %s197, 1
    %199 = vsyncpa [#allocation4], 1
    %s200 = scalar_lea.sflag [#allocation4], 1
    %201 = vsyncpa %s200, 1

</llo_original>
